<compile_context>
chip_gen: v5e
topology: v5e:2x2
jax: 0.10.0
libtpu: 0.0.40
codegen_flags: <defaults>
</compile_context>

<pallas_src>
from functools import partial

import jax
import jax.numpy as jnp
from jax.experimental import pallas as pl
from jax.experimental.pallas import tpu as pltpu


def _vmem_limit_bytes():
    """Scoped-VMEM limit with headroom on every generation (v5e/v6e: 128 MiB, v7x: 64 MiB)."""
    try:
        info = pltpu.get_tpu_info()
        cap = getattr(info, "vmem_capacity_bytes", None)
        if cap:
            return int(min(cap * 3 // 4, 100 * 1024 * 1024))
    except Exception:
        pass
    return 48 * 1024 * 1024   # safe everywhere (v7x has 64 MiB physical)


_VMEM_LIMIT = _vmem_limit_bytes()
_MLP_TILES = (1024, 512, 256, 128)     # lane-dim tiles for the plain MLP passes
_INTERP_TILES = (512, 256, 128)        # keeps ~6 x TN x S x 4B of [S,TN] temporaries modest


def _pick_tile(n, candidates):
    # Prefer an exact divisor (no masked tail); else largest 128-multiple candidate (cdiv grid
    # with a masked tail); else the whole (small) axis as a single full-dim block.
    for t in candidates:
        if t <= n and n % t == 0:
            return t
    for t in candidates:
        if t <= n:
            return t
    return n


# --------------------------------------------------------------------------------------
# In-kernel helpers
# --------------------------------------------------------------------------------------
def _tail_mask(n_total, tn):
    """Boolean [1, tn] of valid lanes for this N tile, or None if N divides evenly (static)."""
    if n_total % tn == 0:
        return None
    base = pl.program_id(1) * tn
    col = jax.lax.broadcasted_iota(jnp.int32, (1, tn), 1)
    return (base + col) < n_total


def _accum_stats(sum_ref, sq_ref, y, mask):
    """Accumulate per-channel sum / sum^2 of the f32 pre-BN activation over the N-tile axis."""
    @pl.when(pl.program_id(1) == 0)
    def _():
        sum_ref[...] = jnp.zeros_like(sum_ref)
        sq_ref[...] = jnp.zeros_like(sq_ref)

    ym = y if mask is None else jnp.where(mask, y, 0.0)
    sum_ref[0] += jnp.sum(ym, axis=1, keepdims=True)
    sq_ref[0] += jnp.sum(ym * ym, axis=1, keepdims=True)


def _interp_tile(x1, x2, p2_bf16):
    """3-NN inverse-distance interpolation of one N tile, entirely in VMEM.

    x1: [3, TN] f32 targets, x2: [S, 3] f32 sources, p2_bf16: [D2, S] bf16 source features.
    Returns the interpolated features [D2, TN] in f32.
    """
    c_dim, tn = x1.shape
    s = x2.shape[0]
    k = min(3, s)

    # Squared pairwise distances [S, TN] with 3 VPU broadcast/FMA passes (non-negative).
    d = None
    for c in range(c_dim):
        diff = x2[:, c:c + 1] - x1[c:c + 1, :]          # [S,1] - [1,TN] -> [S,TN]
        d = diff * diff if d is None else d + diff * diff

    # Pack (distance, source row) into one order-preserving int32 key: the low `nbits`
    # mantissa bits carry the row index, so ONE XLU min per pass yields both the (slightly
    # truncated) nearest distance and its first-occurrence index (stable, like torch.sort).
    nbits = max(1, (s - 1).bit_length())
    notmask = jnp.int32(~((1 << nbits) - 1))
    big = jnp.int32(0x7F800000)                         # +inf bit pattern > any finite key
    row = jax.lax.broadcasted_iota(jnp.int32, (s, tn), 0)
    kk = (pltpu.bitcast(d, jnp.int32) & notmask) | row

    w = None                                            # sparse weights, <= k nonzero per column
    for p in range(k):
        kmin = jnp.min(kk, axis=0, keepdims=True)       # [1, TN]
        dmin = pltpu.bitcast(kmin & notmask, jnp.float32)
        recip = pl.reciprocal(dmin + 1e-8, approx=True)  # EUP
        sel = kk == kmin                                # exactly one True per column
        contrib = jnp.where(sel, recip, 0.0)
        w = contrib if w is None else w + contrib
        if p + 1 < k:                                   # last pass: skip the dead mask update
            kk = jnp.where(sel, big, kk)

    # Normalize in f32 BEFORE the bf16 cast (weights <= 1 -> no large-magnitude bf16 error).
    w = w * pl.reciprocal(jnp.sum(w, axis=0, keepdims=True), approx=True)
    # interpolated = points2 @ W  on the MXU (bf16 operands, f32 accumulation) -> [D2, TN]
    return jnp.dot(p2_bf16, w.astype(jnp.bfloat16), preferred_element_type=jnp.float32)


# --------------------------------------------------------------------------------------
# Kernels
# --------------------------------------------------------------------------------------
def _l0_interp_p1_kernel(xyz1_ref, xyz2_ref, p2_ref, p1_ref, w1_ref, w2_ref, b_ref,
                         y_ref, sum_ref, sq_ref, *, n_total, tn):
    # Fused layer 0: in-VMEM interpolation + concat([points1, interp]) as two dots into one acc.
    interp = _interp_tile(xyz1_ref[0], xyz2_ref[0], p2_ref[0])          # [D2, TN] f32
    y = (jnp.dot(w1_ref[...], p1_ref[0].astype(jnp.bfloat16),
                 preferred_element_type=jnp.float32)
         + jnp.dot(w2_ref[...], interp.astype(jnp.bfloat16),
                   preferred_element_type=jnp.float32)
         + b_ref[...])
    y_ref[0] = y.astype(y_ref.dtype)                                    # bf16 store
    _accum_stats(sum_ref, sq_ref, y, _tail_mask(n_total, tn))


def _l0_interp_kernel(xyz1_ref, xyz2_ref, p2_ref, w2_ref, b_ref,
                      y_ref, sum_ref, sq_ref, *, n_total, tn):
    # Fused layer 0 without points1.
    interp = _interp_tile(xyz1_ref[0], xyz2_ref[0], p2_ref[0])
    y = jnp.dot(w2_ref[...], interp.astype(jnp.bfloat16),
                preferred_element_type=jnp.float32) + b_ref[...]
    y_ref[0] = y.astype(y_ref.dtype)
    _accum_stats(sum_ref, sq_ref, y, _tail_mask(n_total, tn))


def _l0_plain_kernel(x_ref, w_ref, b_ref, y_ref, sum_ref, sq_ref, *, n_total, tn):
    # Layer 0 on a precomputed bf16 input (S == 1 broadcast fallback).
    y = jnp.dot(w_ref[...], x_ref[0], preferred_element_type=jnp.float32) + b_ref[...]
    y_ref[0] = y.astype(y_ref.dtype)
    _accum_stats(sum_ref, sq_ref, y, _tail_mask(n_total, tn))


def _pass1_act_kernel(x_ref, scale_ref, shift_ref, w_ref, b_ref,
                      y_ref, sum_ref, sq_ref, *, n_total, tn):
    # Layers 1..L-1: previous layer's BN+ReLU fused in front of this layer's conv.
    xa = jnp.maximum(x_ref[0].astype(jnp.float32) * scale_ref[...] + shift_ref[...], 0.0)
    y = jnp.dot(w_ref[...], xa.astype(jnp.bfloat16),
                preferred_element_type=jnp.float32) + b_ref[...]
    y_ref[0] = y.astype(y_ref.dtype)
    _accum_stats(sum_ref, sq_ref, y, _tail_mask(n_total, tn))


def _pass2_kernel(y_ref, scale_ref, shift_ref, o_ref):
    # Final standalone BN+ReLU (affine-folded), f32 output in the PyTorch [B, D', N] layout.
    o_ref[0] = jnp.maximum(y_ref[0].astype(jnp.float32) * scale_ref[...] + shift_ref[...], 0.0)


# --------------------------------------------------------------------------------------
# pallas_call wrappers
# --------------------------------------------------------------------------------------
def _pass1_outs(B, Cout, N, tn):
    out_shape = (jax.ShapeDtypeStruct((B, Cout, N), jnp.bfloat16),     # pre-BN activation
                 jax.ShapeDtypeStruct((B, Cout, 1), jnp.float32),      # per-batch sum
                 jax.ShapeDtypeStruct((B, Cout, 1), jnp.float32))      # per-batch sum of squares
    out_specs = (pl.BlockSpec((1, Cout, tn), lambda b, n: (b, 0, n)),
                 pl.BlockSpec((1, Cout, 1), lambda b, n: (b, 0, 0)),   # accumulator over N tiles
                 pl.BlockSpec((1, Cout, 1), lambda b, n: (b, 0, 0)))
    return out_shape, out_specs


def _layer0_interp(xyz1, xyz2_t, p2_bf, points1, w1_bf, w2_bf, b):
    """Fused interpolation + first conv.  xyz1 [B,3,N], xyz2_t [B,S,3], p2_bf [B,D2,S] bf16."""
    B, C, N = xyz1.shape
    S = xyz2_t.shape[1]
    D2 = p2_bf.shape[1]
    Cout = w2_bf.shape[0]
    D1 = points1.shape[1] if points1 is not None else 0
    tn = _pick_tile(N, _INTERP_TILES)
    grid = (B, pl.cdiv(N, tn))
    out_shape, out_specs = _pass1_outs(B, Cout, N, tn)

    in_specs = [
        pl.BlockSpec((1, C, tn), lambda bb, n: (bb, 0, n)),
        pl.BlockSpec((1, S, C), lambda bb, n: (bb, 0, 0)),    # resident across N tiles
        pl.BlockSpec((1, D2, S), lambda bb, n: (bb, 0, 0)),   # resident across N tiles
    ]
    args = [xyz1, xyz2_t, p2_bf]
    if points1 is not None:
        in_specs += [pl.BlockSpec((1, D1, tn), lambda bb, n: (bb, 0, n)),
                     pl.BlockSpec((Cout, D1), lambda bb, n: (0, 0))]
        args += [points1, w1_bf]
        kernel = partial(_l0_interp_p1_kernel, n_total=N, tn=tn)
    else:
        kernel = partial(_l0_interp_kernel, n_total=N, tn=tn)
    in_specs += [pl.BlockSpec((Cout, D2), lambda bb, n: (0, 0)),
                 pl.BlockSpec((Cout, 1), lambda bb, n: (0, 0))]
    args += [w2_bf, b]

    cost = pl.CostEstimate(
        flops=int(B * N * (30 * S + 2 * S * D2 + 2 * (D1 + D2) * Cout)),
        transcendentals=int(4 * B * N),
        bytes_accessed=int(4 * B * N * (3 + D1) + 4 * 3 * B * S + 2 * B * D2 * S
                           + 2 * B * Cout * N + 2 * Cout * (D1 + D2) + 12 * B * Cout))

    return pl.pallas_call(
        kernel,
        out_shape=out_shape,
        grid=grid,
        in_specs=in_specs,
        out_specs=out_specs,
        compiler_params=pltpu.CompilerParams(
            dimension_semantics=("parallel", "arbitrary"),   # stats accumulate over N tiles
            vmem_limit_bytes=_VMEM_LIMIT),
        cost_estimate=cost,
    )(*args)


def _layer0_plain(x_bf, w_bf, b):
    B, Cin, N = x_bf.shape
    Cout = w_bf.shape[0]
    tn = _pick_tile(N, _MLP_TILES)
    out_shape, out_specs = _pass1_outs(B, Cout, N, tn)
    return pl.pallas_call(
        partial(_l0_plain_kernel, n_total=N, tn=tn),
        out_shape=out_shape,
        grid=(B, pl.cdiv(N, tn)),
        in_specs=[pl.BlockSpec((1, Cin, tn), lambda bb, n: (bb, 0, n)),
                  pl.BlockSpec((Cout, Cin), lambda bb, n: (0, 0)),
                  pl.BlockSpec((Cout, 1), lambda bb, n: (0, 0))],
        out_specs=out_specs,
        compiler_params=pltpu.CompilerParams(
            dimension_semantics=("parallel", "arbitrary"),
            vmem_limit_bytes=_VMEM_LIMIT),
        cost_estimate=pl.CostEstimate(
            flops=int(2 * B * N * Cin * Cout), transcendentals=0,
            bytes_accessed=int(2 * B * N * (Cin + Cout) + 2 * Cin * Cout + 12 * B * Cout)),
    )(x_bf, w_bf, b)


def _pass1_act(x_bf, scale, shift, w_bf, b):
    B, Cin, N = x_bf.shape
    Cout = w_bf.shape[0]
    tn = _pick_tile(N, _MLP_TILES)
    out_shape, out_specs = _pass1_outs(B, Cout, N, tn)
    return pl.pallas_call(
        partial(_pass1_act_kernel, n_total=N, tn=tn),
        out_shape=out_shape,
        grid=(B, pl.cdiv(N, tn)),
        in_specs=[pl.BlockSpec((1, Cin, tn), lambda bb, n: (bb, 0, n)),
                  pl.BlockSpec((Cin, 1), lambda bb, n: (0, 0)),
                  pl.BlockSpec((Cin, 1), lambda bb, n: (0, 0)),
                  pl.BlockSpec((Cout, Cin), lambda bb, n: (0, 0)),
                  pl.BlockSpec((Cout, 1), lambda bb, n: (0, 0))],
        out_specs=out_specs,
        compiler_params=pltpu.CompilerParams(
            dimension_semantics=("parallel", "arbitrary"),
            vmem_limit_bytes=_VMEM_LIMIT),
        cost_estimate=pl.CostEstimate(
            flops=int(2 * B * N * Cin * Cout + 4 * B * N * Cin), transcendentals=0,
            bytes_accessed=int(2 * B * N * (Cin + Cout) + 2 * Cin * Cout
                               + 12 * B * Cout + 8 * Cin)),
    )(x_bf, scale, shift, w_bf, b)


def _pass2(y_bf, scale, shift):
    B, Cout, N = y_bf.shape
    tn = _pick_tile(N, _MLP_TILES)
    return pl.pallas_call(
        _pass2_kernel,
        out_shape=jax.ShapeDtypeStruct((B, Cout, N), jnp.float32),
        grid=(B, pl.cdiv(N, tn)),
        in_specs=[pl.BlockSpec((1, Cout, tn), lambda bb, n: (bb, 0, n)),
                  pl.BlockSpec((Cout, 1), lambda bb, n: (0, 0)),
                  pl.BlockSpec((Cout, 1), lambda bb, n: (0, 0))],
        out_specs=pl.BlockSpec((1, Cout, tn), lambda bb, n: (bb, 0, n)),
        compiler_params=pltpu.CompilerParams(
            dimension_semantics=("parallel", "parallel"),
            vmem_limit_bytes=_VMEM_LIMIT),
        cost_estimate=pl.CostEstimate(
            flops=int(3 * B * N * Cout), transcendentals=0,
            bytes_accessed=int(6 * B * N * Cout + 8 * Cout)),
    )(y_bf, scale, shift)


def _bn_scale_shift(sums, sqs, gamma, beta, count):
    """Finalize BatchNorm1d training-mode statistics over all B*N points -> affine (scale, shift)."""
    cnt = jnp.float32(count)
    mean = jnp.sum(sums, axis=0) / cnt                 # [Cout, 1]
    ex2 = jnp.sum(sqs, axis=0) / cnt
    var = jnp.maximum(ex2 - mean * mean, 0.0)          # biased batch variance
    inv = jax.lax.rsqrt(var + 1e-5)                    # BatchNorm1d default eps
    scale = gamma * inv
    shift = beta - mean * scale
    return scale, shift


# --------------------------------------------------------------------------------------
# Public forward
# --------------------------------------------------------------------------------------
def pointnet_feature_propagation(xyz1, xyz2, points1, points2, params):
    """
    PyTorch-equivalent forward (training-mode BatchNorm statistics).
      xyz1:    [B, 3, N]
      xyz2:    [B, 3, S]
      points1: [B, D1, N] or None
      points2: [B, D2, S]
      params:  list of (W [Cout, Cin], bias [Cout, 1], gamma [Cout, 1], beta [Cout, 1])
    Returns: [B, D', N] float32
    """
    B, _, N = xyz1.shape
    S = xyz2.shape[2]
    D2 = points2.shape[1]
    assert len(params) >= 1, "mlp must contain at least one layer"

    xyz1 = xyz1.astype(jnp.float32)
    p2_bf = points2.astype(jnp.bfloat16)                     # resident operand: pre-cast once
    w_bf = [w.astype(jnp.bfloat16) for (w, _, _, _) in params]   # weights: pre-cast once

    # ---- layer 0: interpolation (+ optional concat with points1) fused into the first conv ----
    w0, b0, g0, beta0 = params[0]
    if S == 1:
        # torch: points2.repeat(1, N, 1) -> broadcast the single source feature to all N targets.
        interp_bf = jnp.broadcast_to(p2_bf, (B, D2, N))
        x0 = interp_bf if points1 is None else jnp.concatenate(
            [points1.astype(jnp.bfloat16), interp_bf], axis=1)
        y, sums, sqs = _layer0_plain(x0, w_bf[0], b0)
    else:
        xyz2_t = jnp.transpose(xyz2, (0, 2, 1)).astype(jnp.float32)   # tiny [B, S, 3]
        if points1 is None:
            y, sums, sqs = _layer0_interp(xyz1, xyz2_t, p2_bf, None, None, w_bf[0], b0)
        else:
            D1 = points1.shape[1]
            y, sums, sqs = _layer0_interp(xyz1, xyz2_t, p2_bf, points1.astype(jnp.float32),
                                          w_bf[0][:, :D1], w_bf[0][:, D1:], b0)
    scale, shift = _bn_scale_shift(sums, sqs, g0, beta0, B * N)

    # ---- layers 1..L-1: previous layer's BN+ReLU fused in front of this layer's conv ----
    for li in range(1, len(params)):
        w, b, g, beta = params[li]
        y, sums, sqs = _pass1_act(y, scale, shift, w_bf[li], b)
        scale, shift = _bn_scale_shift(sums, sqs, g, beta, B * N)

    # ---- final BN+ReLU ----
    return _pass2(y, scale, shift)


# --------------------------------------------------------------------------------------
# Pure-JAX reference (mirrors the PyTorch module, training-mode BatchNorm)
# --------------------------------------------------------------------------------------
def _reference(xyz1, xyz2, points1, points2, params):
    x1 = jnp.transpose(xyz1, (0, 2, 1))
    x2 = jnp.transpose(xyz2, (0, 2, 1))
    p2 = jnp.transpose(points2, (0, 2, 1))
    B, N, _ = x1.shape
    S = x2.shape[1]
    if S == 1:
        interp = jnp.broadcast_to(p2, (B, N, p2.shape[-1]))
    else:
        d = jnp.sum((x1[:, :, None, :] - x2[:, None, :, :]) ** 2, -1)
        neg_d, idx = jax.lax.top_k(-d, 3)
        recip = 1.0 / (-neg_d + 1e-8)
        wgt = recip / jnp.sum(recip, -1, keepdims=True)
        gathered = p2[jnp.arange(B)[:, None, None], idx]          # [B,N,3,D2]
        interp = jnp.sum(gathered * wgt[..., None], axis=2)
    if points1 is not None:
        new = jnp.concatenate([jnp.transpose(points1, (0, 2, 1)), interp], axis=-1)
    else:
        new = interp
    x = jnp.transpose(new, (0, 2, 1))
    for (w, b, g, beta) in params:
        y = jnp.einsum('oc,bcn->bon', w, x) + b[None]
        mean = jnp.mean(y, axis=(0, 2), keepdims=True)
        var = jnp.mean((y - mean) ** 2, axis=(0, 2), keepdims=True)
        x = jnp.maximum((y - mean) / jnp.sqrt(var + 1e-5) * g[None] + beta[None], 0.0)
    return x


if __name__ == "__main__":
    key = jax.random.PRNGKey(0)

    def make_params(pk, in_channel, mlp):
        params = []
        last = in_channel
        for out_ch in mlp:
            pk, k1, k2 = jax.random.split(pk, 3)
            w = jax.random.normal(k1, (out_ch, last), jnp.float32) * 0.1
            b = jax.random.normal(k2, (out_ch, 1), jnp.float32) * 0.1
            g = jnp.ones((out_ch, 1), jnp.float32)
            beta = jnp.zeros((out_ch, 1), jnp.float32)
            params.append((w, b, g, beta))
            last = out_ch
        return params

    def run_case(k, B, N, S, D1, D2, mlp):
        ks = jax.random.split(k, 5)
        xyz1 = jax.random.normal(ks[0], (B, 3, N), jnp.float32)
        xyz2 = jax.random.normal(ks[1], (B, 3, S), jnp.float32)
        points1 = jax.random.normal(ks[2], (B, D1, N), jnp.float32)
        points2 = jax.random.normal(ks[3], (B, D2, S), jnp.float32)
        params = make_params(ks[4], D1 + D2, mlp)
        out = jax.block_until_ready(
            pointnet_feature_propagation(xyz1, xyz2, points1, points2, params))
        assert out.shape == (B, mlp[-1], N), out.shape
        assert bool(jnp.all(jnp.isfinite(out)))
        ref = _reference(xyz1, xyz2, points1, points2, params)
        err = float(jnp.max(jnp.abs(out - ref)))
        tol = 5e-2 * max(1.0, float(jnp.max(jnp.abs(ref))))   # bf16 activations / approx recip
        assert err <= tol, (err, tol)

    k1, k2 = jax.random.split(key)
    run_case(k1, B=2, N=16, S=8, D1=5, D2=6, mlp=[32, 16])       # tiny spec-like shapes
    run_case(k2, B=2, N=200, S=64, D1=16, D2=32, mlp=[64, 32])   # ragged N -> masked-tail path
    print("KERNEL_OK")
</pallas_src>

<mosaic_0001>
module attributes {stable_mosaic.version = 11 : i64} {
  func.func @_l0_interp_p1_kernel(%arg0: i32, %arg1: i32, %arg2: memref<1x3x16xf32, #tpu.memory_space<vmem>>, %arg3: memref<1x8x3xf32, #tpu.memory_space<vmem>>, %arg4: memref<1x6x8xbf16, #tpu.memory_space<vmem>>, %arg5: memref<1x5x16xf32, #tpu.memory_space<vmem>>, %arg6: memref<32x5xbf16, #tpu.memory_space<vmem>>, %arg7: memref<32x6xbf16, #tpu.memory_space<vmem>>, %arg8: memref<32x1xf32, #tpu.memory_space<vmem>>, %arg9: memref<1x32x16xbf16, #tpu.memory_space<vmem>>, %arg10: memref<1x32x1xf32, #tpu.memory_space<vmem>>, %arg11: memref<1x32x1xf32, #tpu.memory_space<vmem>>) attributes {dimension_semantics = [#tpu.dimension_semantics<parallel>, #tpu.dimension_semantics<arbitrary>], iteration_bounds = array<i64: 2, 1>, scalar_prefetch = 0 : i64, scratch_operands = 0 : i64, tpu.core_type = #tpu.core_type<tc>, window_params = [{transform_indices = @transform_0, window_bounds = array<i64: 1, 3, 16>}, {transform_indices = @transform_1, window_bounds = array<i64: 1, 8, 3>}, {transform_indices = @transform_2, window_bounds = array<i64: 1, 6, 8>}, {transform_indices = @transform_3, window_bounds = array<i64: 1, 5, 16>}, {pipeline_mode = #tpu.pipeline_mode<synchronous>, transform_indices = @transform_4, window_bounds = array<i64: 32, 5>}, {pipeline_mode = #tpu.pipeline_mode<synchronous>, transform_indices = @transform_5, window_bounds = array<i64: 32, 6>}, {pipeline_mode = #tpu.pipeline_mode<synchronous>, transform_indices = @transform_6, window_bounds = array<i64: 32, 1>}, {transform_indices = @transform_7, window_bounds = array<i64: 1, 32, 16>}, {transform_indices = @transform_8, window_bounds = array<i64: 1, 32, 1>}, {transform_indices = @transform_9, window_bounds = array<i64: 1, 32, 1>}]} {
    %c0 = arith.constant 0 : index
    %c0_0 = arith.constant 0 : index
    %c0_1 = arith.constant 0 : index
    %0 = vector.load %arg2[%c0, %c0_0, %c0_1] : memref<1x3x16xf32, #tpu.memory_space<vmem>>, vector<1x3x16xf32>
    %1 = vector.shape_cast %0 : vector<1x3x16xf32> to vector<3x16xf32>
    %c0_2 = arith.constant 0 : index
    %c0_3 = arith.constant 0 : index
    %c0_4 = arith.constant 0 : index
    %2 = vector.load %arg3[%c0_2, %c0_3, %c0_4] : memref<1x8x3xf32, #tpu.memory_space<vmem>>, vector<1x8x3xf32>
    %3 = vector.shape_cast %2 : vector<1x8x3xf32> to vector<8x3xf32>
    %c0_5 = arith.constant 0 : index
    %c0_6 = arith.constant 0 : index
    %c0_7 = arith.constant 0 : index
    %4 = vector.load %arg4[%c0_5, %c0_6, %c0_7] : memref<1x6x8xbf16, #tpu.memory_space<vmem>>, vector<1x6x8xbf16>
    %5 = vector.shape_cast %4 : vector<1x6x8xbf16> to vector<6x8xbf16>
    %6 = vector.extract_strided_slice %3 {offsets = [0, 0], sizes = [8, 1], strides = [1, 1]} : vector<8x3xf32> to vector<8x1xf32>
    %7 = vector.extract_strided_slice %1 {offsets = [0, 0], sizes = [1, 16], strides = [1, 1]} : vector<3x16xf32> to vector<1x16xf32>
    %8 = vector.broadcast %6 : vector<8x1xf32> to vector<8x16xf32>
    %9 = vector.broadcast %7 : vector<1x16xf32> to vector<8x16xf32>
    %10 = arith.subf %8, %9 : vector<8x16xf32>
    %11 = arith.mulf %10, %10 : vector<8x16xf32>
    %12 = vector.extract_strided_slice %3 {offsets = [0, 1], sizes = [8, 1], strides = [1, 1]} : vector<8x3xf32> to vector<8x1xf32>
    %13 = vector.extract_strided_slice %1 {offsets = [1, 0], sizes = [1, 16], strides = [1, 1]} : vector<3x16xf32> to vector<1x16xf32>
    %14 = vector.broadcast %12 : vector<8x1xf32> to vector<8x16xf32>
    %15 = vector.broadcast %13 : vector<1x16xf32> to vector<8x16xf32>
    %16 = arith.subf %14, %15 : vector<8x16xf32>
    %17 = arith.mulf %16, %16 : vector<8x16xf32>
    %18 = arith.addf %11, %17 : vector<8x16xf32>
    %19 = vector.extract_strided_slice %3 {offsets = [0, 2], sizes = [8, 1], strides = [1, 1]} : vector<8x3xf32> to vector<8x1xf32>
    %20 = vector.extract_strided_slice %1 {offsets = [2, 0], sizes = [1, 16], strides = [1, 1]} : vector<3x16xf32> to vector<1x16xf32>
    %21 = vector.broadcast %19 : vector<8x1xf32> to vector<8x16xf32>
    %22 = vector.broadcast %20 : vector<1x16xf32> to vector<8x16xf32>
    %23 = arith.subf %21, %22 : vector<8x16xf32>
    %24 = arith.mulf %23, %23 : vector<8x16xf32>
    %25 = arith.addf %18, %24 : vector<8x16xf32>
    %26 = tpu.iota {dimensions = array<i32: 0>} : vector<8x16xi32>
    %27 = tpu.bitcast %25 : vector<8x16xf32> -> vector<8x16xi32>
    %c-8_i32 = arith.constant -8 : i32
    %28 = vector.broadcast %c-8_i32 : i32 to vector<8x16xi32>
    %29 = arith.andi %27, %28 : vector<8x16xi32>
    %30 = arith.ori %29, %26 : vector<8x16xi32>
    %cst = arith.constant dense<2147483647> : vector<16xi32>
    %31 = vector.multi_reduction <minsi>, %30, %cst [0] : vector<8x16xi32> to vector<16xi32>
    %32 = vector.shape_cast %31 : vector<16xi32> to vector<1x16xi32>
    %c-8_i32_8 = arith.constant -8 : i32
    %33 = vector.broadcast %c-8_i32_8 : i32 to vector<1x16xi32>
    %34 = arith.andi %32, %33 : vector<1x16xi32>
    %35 = tpu.bitcast %34 : vector<1x16xi32> -> vector<1x16xf32>
    %cst_9 = arith.constant 9.99999993E-9 : f32
    %36 = vector.broadcast %cst_9 : f32 to vector<1x16xf32>
    %37 = arith.addf %35, %36 : vector<1x16xf32>
    %38 = tpu.reciprocal %37 {approx = true} : vector<1x16xf32> -> vector<1x16xf32>
    %39 = vector.broadcast %32 : vector<1x16xi32> to vector<8x16xi32>
    %40 = arith.cmpi eq, %30, %39 : vector<8x16xi32>
    %cst_10 = arith.constant 0.000000e+00 : f32
    %41 = vector.shape_cast %38 : vector<1x16xf32> to vector<1x16xf32>
    %42 = vector.broadcast %41 : vector<1x16xf32> to vector<8x16xf32>
    %43 = vector.broadcast %cst_10 : f32 to vector<8x16xf32>
    %44 = arith.select %40, %42, %43 : vector<8x16xi1>, vector<8x16xf32>
    %c2139095040_i32 = arith.constant 2139095040 : i32
    %45 = vector.broadcast %c2139095040_i32 : i32 to vector<8x16xi32>
    %46 = arith.select %40, %45, %30 : vector<8x16xi1>, vector<8x16xi32>
    %cst_11 = arith.constant dense<2147483647> : vector<16xi32>
    %47 = vector.multi_reduction <minsi>, %46, %cst_11 [0] : vector<8x16xi32> to vector<16xi32>
    %48 = vector.shape_cast %47 : vector<16xi32> to vector<1x16xi32>
    %c-8_i32_12 = arith.constant -8 : i32
    %49 = vector.broadcast %c-8_i32_12 : i32 to vector<1x16xi32>
    %50 = arith.andi %48, %49 : vector<1x16xi32>
    %51 = tpu.bitcast %50 : vector<1x16xi32> -> vector<1x16xf32>
    %cst_13 = arith.constant 9.99999993E-9 : f32
    %52 = vector.broadcast %cst_13 : f32 to vector<1x16xf32>
    %53 = arith.addf %51, %52 : vector<1x16xf32>
    %54 = tpu.reciprocal %53 {approx = true} : vector<1x16xf32> -> vector<1x16xf32>
    %55 = vector.broadcast %48 : vector<1x16xi32> to vector<8x16xi32>
    %56 = arith.cmpi eq, %46, %55 : vector<8x16xi32>
    %cst_14 = arith.constant 0.000000e+00 : f32
    %57 = vector.shape_cast %54 : vector<1x16xf32> to vector<1x16xf32>
    %58 = vector.broadcast %57 : vector<1x16xf32> to vector<8x16xf32>
    %59 = vector.broadcast %cst_14 : f32 to vector<8x16xf32>
    %60 = arith.select %56, %58, %59 : vector<8x16xi1>, vector<8x16xf32>
    %61 = arith.addf %44, %60 : vector<8x16xf32>
    %c2139095040_i32_15 = arith.constant 2139095040 : i32
    %62 = vector.broadcast %c2139095040_i32_15 : i32 to vector<8x16xi32>
    %63 = arith.select %56, %62, %46 : vector<8x16xi1>, vector<8x16xi32>
    %cst_16 = arith.constant dense<2147483647> : vector<16xi32>
    %64 = vector.multi_reduction <minsi>, %63, %cst_16 [0] : vector<8x16xi32> to vector<16xi32>
    %65 = vector.shape_cast %64 : vector<16xi32> to vector<1x16xi32>
    %c-8_i32_17 = arith.constant -8 : i32
    %66 = vector.broadcast %c-8_i32_17 : i32 to vector<1x16xi32>
    %67 = arith.andi %65, %66 : vector<1x16xi32>
    %68 = tpu.bitcast %67 : vector<1x16xi32> -> vector<1x16xf32>
    %cst_18 = arith.constant 9.99999993E-9 : f32
    %69 = vector.broadcast %cst_18 : f32 to vector<1x16xf32>
    %70 = arith.addf %68, %69 : vector<1x16xf32>
    %71 = tpu.reciprocal %70 {approx = true} : vector<1x16xf32> -> vector<1x16xf32>
    %72 = vector.broadcast %65 : vector<1x16xi32> to vector<8x16xi32>
    %73 = arith.cmpi eq, %63, %72 : vector<8x16xi32>
    %cst_19 = arith.constant 0.000000e+00 : f32
    %74 = vector.shape_cast %71 : vector<1x16xf32> to vector<1x16xf32>
    %75 = vector.broadcast %74 : vector<1x16xf32> to vector<8x16xf32>
    %76 = vector.broadcast %cst_19 : f32 to vector<8x16xf32>
    %77 = arith.select %73, %75, %76 : vector<8x16xi1>, vector<8x16xf32>
    %78 = arith.addf %61, %77 : vector<8x16xf32>
    %cst_20 = arith.constant dense<0.000000e+00> : vector<16xf32>
    %79 = vector.multi_reduction <add>, %78, %cst_20 [0] : vector<8x16xf32> to vector<16xf32>
    %80 = vector.shape_cast %79 : vector<16xf32> to vector<1x16xf32>
    %81 = tpu.reciprocal %80 {approx = true} : vector<1x16xf32> -> vector<1x16xf32>
    %82 = vector.broadcast %81 : vector<1x16xf32> to vector<8x16xf32>
    %83 = arith.mulf %78, %82 : vector<8x16xf32>
    %84 = arith.truncf %83 : vector<8x16xf32> to vector<8x16xbf16>
    %cst_21 = arith.constant dense<0.000000e+00> : vector<6x16xf32>
    %85 = tpu.matmul %5, %84, %cst_21 {dimension_numbers = #tpu.dot_dimension_numbers<[1], [0], [0], [1], [0, 0, 1, 1], [], []>} : vector<6x8xbf16>, vector<8x16xbf16>, vector<6x16xf32> -> vector<6x16xf32>
    %c0_22 = arith.constant 0 : index
    %c0_23 = arith.constant 0 : index
    %86 = vector.load %arg6[%c0_22, %c0_23] : memref<32x5xbf16, #tpu.memory_space<vmem>>, vector<32x5xbf16>
    %c0_24 = arith.constant 0 : index
    %c0_25 = arith.constant 0 : index
    %c0_26 = arith.constant 0 : index
    %87 = vector.load %arg5[%c0_24, %c0_25, %c0_26] : memref<1x5x16xf32, #tpu.memory_space<vmem>>, vector<1x5x16xf32>
    %88 = vector.shape_cast %87 : vector<1x5x16xf32> to vector<5x16xf32>
    %89 = arith.truncf %88 : vector<5x16xf32> to vector<5x16xbf16>
    %cst_27 = arith.constant dense<0.000000e+00> : vector<32x16xf32>
    %90 = tpu.matmul %86, %89, %cst_27 {dimension_numbers = #tpu.dot_dimension_numbers<[1], [0], [0], [1], [0, 0, 1, 1], [], []>} : vector<32x5xbf16>, vector<5x16xbf16>, vector<32x16xf32> -> vector<32x16xf32>
    %c0_28 = arith.constant 0 : index
    %c0_29 = arith.constant 0 : index
    %91 = vector.load %arg7[%c0_28, %c0_29] : memref<32x6xbf16, #tpu.memory_space<vmem>>, vector<32x6xbf16>
    %92 = arith.truncf %85 : vector<6x16xf32> to vector<6x16xbf16>
    %cst_30 = arith.constant dense<0.000000e+00> : vector<32x16xf32>
    %93 = tpu.matmul %91, %92, %cst_30 {dimension_numbers = #tpu.dot_dimension_numbers<[1], [0], [0], [1], [0, 0, 1, 1], [], []>} : vector<32x6xbf16>, vector<6x16xbf16>, vector<32x16xf32> -> vector<32x16xf32>
    %94 = arith.addf %90, %93 : vector<32x16xf32>
    %c0_31 = arith.constant 0 : index
    %c0_32 = arith.constant 0 : index
    %95 = vector.load %arg8[%c0_31, %c0_32] : memref<32x1xf32, #tpu.memory_space<vmem>>, vector<32x1xf32>
    %96 = vector.broadcast %95 : vector<32x1xf32> to vector<32x16xf32>
    %97 = arith.addf %94, %96 : vector<32x16xf32>
    %98 = arith.truncf %97 : vector<32x16xf32> to vector<32x16xbf16>
    %c0_33 = arith.constant 0 : index
    %c0_34 = arith.constant 0 : index
    %c0_35 = arith.constant 0 : index
    %99 = vector.load %arg9[%c0_33, %c0_34, %c0_35] : memref<1x32x16xbf16, #tpu.memory_space<vmem>>, vector<1x32x16xbf16>
    %100 = vector.shape_cast %99 : vector<1x32x16xbf16> to vector<32x16xbf16>
    %101 = vector.shape_cast %98 : vector<32x16xbf16> to vector<1x32x16xbf16>
    tpu.vector_store %arg9[%c0_33, %c0_34, %c0_35], %101 {strides = array<i32>} : memref<1x32x16xbf16, #tpu.memory_space<vmem>>, vector<1x32x16xbf16>,
    %c0_i32 = arith.constant 0 : i32
    %102 = arith.cmpi eq, %arg1, %c0_i32 : i32
    %103 = arith.extui %102 : i1 to i32
    %c0_i32_36 = arith.constant 0 : i32
    %104 = arith.cmpi ne, %103, %c0_i32_36 : i32
    scf.if %104 {
      %cst_51 = arith.constant 0.000000e+00 : f32
      %122 = vector.broadcast %cst_51 : f32 to vector<1x32x1xf32>
      %c0_52 = arith.constant 0 : index
      %c0_53 = arith.constant 0 : index
      %c0_54 = arith.constant 0 : index
      %123 = vector.load %arg10[%c0_52, %c0_53, %c0_54] : memref<1x32x1xf32, #tpu.memory_space<vmem>>, vector<1x32x1xf32>
      tpu.vector_store %arg10[%c0_52, %c0_53, %c0_54], %122 {strides = array<i32>} : memref<1x32x1xf32, #tpu.memory_space<vmem>>, vector<1x32x1xf32>,
      %cst_55 = arith.constant 0.000000e+00 : f32
      %124 = vector.broadcast %cst_55 : f32 to vector<1x32x1xf32>
      %c0_56 = arith.constant 0 : index
      %c0_57 = arith.constant 0 : index
      %c0_58 = arith.constant 0 : index
      %125 = vector.load %arg11[%c0_56, %c0_57, %c0_58] : memref<1x32x1xf32, #tpu.memory_space<vmem>>, vector<1x32x1xf32>
      tpu.vector_store %arg11[%c0_56, %c0_57, %c0_58], %124 {strides = array<i32>} : memref<1x32x1xf32, #tpu.memory_space<vmem>>, vector<1x32x1xf32>,
    } else {
    }
    %c0_37 = arith.constant 0 : index
    %c0_38 = arith.constant 0 : index
    %c0_39 = arith.constant 0 : index
    %105 = vector.load %arg10[%c0_37, %c0_38, %c0_39] : memref<1x32x1xf32, #tpu.memory_space<vmem>>, vector<1x32x1xf32>
    %106 = vector.shape_cast %105 : vector<1x32x1xf32> to vector<32x1xf32>
    %cst_40 = arith.constant dense<0.000000e+00> : vector<32xf32>
    %107 = vector.multi_reduction <add>, %97, %cst_40 [1] : vector<32x16xf32> to vector<32xf32>
    %108 = vector.shape_cast %107 : vector<32xf32> to vector<32x1xf32>
    %109 = arith.addf %106, %108 : vector<32x1xf32>
    %c0_41 = arith.constant 0 : index
    %c0_42 = arith.constant 0 : index
    %c0_43 = arith.constant 0 : index
    %110 = vector.load %arg10[%c0_41, %c0_42, %c0_43] : memref<1x32x1xf32, #tpu.memory_space<vmem>>, vector<1x32x1xf32>
    %111 = vector.shape_cast %110 : vector<1x32x1xf32> to vector<32x1xf32>
    %112 = vector.shape_cast %109 : vector<32x1xf32> to vector<1x32x1xf32>
    tpu.vector_store %arg10[%c0_41, %c0_42, %c0_43], %112 {strides = array<i32>} : memref<1x32x1xf32, #tpu.memory_space<vmem>>, vector<1x32x1xf32>,
    %c0_44 = arith.constant 0 : index
    %c0_45 = arith.constant 0 : index
    %c0_46 = arith.constant 0 : index
    %113 = vector.load %arg11[%c0_44, %c0_45, %c0_46] : memref<1x32x1xf32, #tpu.memory_space<vmem>>, vector<1x32x1xf32>
    %114 = vector.shape_cast %113 : vector<1x32x1xf32> to vector<32x1xf32>
    %115 = arith.mulf %97, %97 : vector<32x16xf32>
    %cst_47 = arith.constant dense<0.000000e+00> : vector<32xf32>
    %116 = vector.multi_reduction <add>, %115, %cst_47 [1] : vector<32x16xf32> to vector<32xf32>
    %117 = vector.shape_cast %116 : vector<32xf32> to vector<32x1xf32>
    %118 = arith.addf %114, %117 : vector<32x1xf32>
    %c0_48 = arith.constant 0 : index
    %c0_49 = arith.constant 0 : index
    %c0_50 = arith.constant 0 : index
    %119 = vector.load %arg11[%c0_48, %c0_49, %c0_50] : memref<1x32x1xf32, #tpu.memory_space<vmem>>, vector<1x32x1xf32>
    %120 = vector.shape_cast %119 : vector<1x32x1xf32> to vector<32x1xf32>
    %121 = vector.shape_cast %118 : vector<32x1xf32> to vector<1x32x1xf32>
    tpu.vector_store %arg11[%c0_48, %c0_49, %c0_50], %121 {strides = array<i32>} : memref<1x32x1xf32, #tpu.memory_space<vmem>>, vector<1x32x1xf32>,
    return
  }
  func.func @transform_0(%arg0: i32, %arg1: i32) -> (i32, i32, i32) {
    %c0_i32 = arith.constant 0 : i32
    %c0_i32_0 = arith.constant 0 : i32
    return %arg0, %c0_i32, %arg1 : i32, i32, i32
  }
  func.func @transform_1(%arg0: i32, %arg1: i32) -> (i32, i32, i32) {
    %c0_i32 = arith.constant 0 : i32
    %c0_i32_0 = arith.constant 0 : i32
    %c0_i32_1 = arith.constant 0 : i32
    return %arg0, %c0_i32, %c0_i32_0 : i32, i32, i32
  }
  func.func @transform_2(%arg0: i32, %arg1: i32) -> (i32, i32, i32) {
    %c0_i32 = arith.constant 0 : i32
    %c0_i32_0 = arith.constant 0 : i32
    %c0_i32_1 = arith.constant 0 : i32
    return %arg0, %c0_i32, %c0_i32_0 : i32, i32, i32
  }
  func.func @transform_3(%arg0: i32, %arg1: i32) -> (i32, i32, i32) {
    %c0_i32 = arith.constant 0 : i32
    %c0_i32_0 = arith.constant 0 : i32
    return %arg0, %c0_i32, %arg1 : i32, i32, i32
  }
  func.func @transform_4(%arg0: i32, %arg1: i32) -> (i32, i32) {
    %c0_i32 = arith.constant 0 : i32
    %c0_i32_0 = arith.constant 0 : i32
    %c0_i32_1 = arith.constant 0 : i32
    return %c0_i32, %c0_i32_0 : i32, i32
  }
  func.func @transform_5(%arg0: i32, %arg1: i32) -> (i32, i32) {
    %c0_i32 = arith.constant 0 : i32
    %c0_i32_0 = arith.constant 0 : i32
    %c0_i32_1 = arith.constant 0 : i32
    return %c0_i32, %c0_i32_0 : i32, i32
  }
  func.func @transform_6(%arg0: i32, %arg1: i32) -> (i32, i32) {
    %c0_i32 = arith.constant 0 : i32
    %c0_i32_0 = arith.constant 0 : i32
    %c0_i32_1 = arith.constant 0 : i32
    return %c0_i32, %c0_i32_0 : i32, i32
  }
  func.func @transform_7(%arg0: i32, %arg1: i32) -> (i32, i32, i32) {
    %c0_i32 = arith.constant 0 : i32
    %c0_i32_0 = arith.constant 0 : i32
    return %arg0, %c0_i32, %arg1 : i32, i32, i32
  }
  func.func @transform_8(%arg0: i32, %arg1: i32) -> (i32, i32, i32) {
    %c0_i32 = arith.constant 0 : i32
    %c0_i32_0 = arith.constant 0 : i32
    %c0_i32_1 = arith.constant 0 : i32
    return %arg0, %c0_i32, %c0_i32_0 : i32, i32, i32
  }
  func.func @transform_9(%arg0: i32, %arg1: i32) -> (i32, i32, i32) {
    %c0_i32 = arith.constant 0 : i32
    %c0_i32_0 = arith.constant 0 : i32
    %c0_i32_1 = arith.constant 0 : i32
    return %arg0, %c0_i32, %c0_i32_0 : i32, i32, i32
  }
}

</mosaic_0001>

<llo_original>
// kernel: tpu_custom_call.1
$region0: #{tpu_custom_call.1}
  #allocation0 [shape = 'u32[]', space=smem, size = 0x4, offset = 0x4, fixed_abs, tag = 'smem constant byte address 0x4 - core index']
  #allocation1 [shape = 'u32[72,128]{1,0:T(1,128)}', space=vmem, size = 0x9000, scoped, tag = 'internal scratch']
  %s0 = inlined_call_operand.vmem [shape: f32[2,3,16], index: 0, kind: input, shape index: {}]
  %s1 = inlined_call_operand.vmem [shape: f32[2,8,3], index: 1, kind: input, shape index: {}]
  %s2 = inlined_call_operand.vmem [shape: bf16[2,6,8], index: 2, kind: input, shape index: {}]
  %s3 = inlined_call_operand.vmem [shape: f32[2,5,16], index: 3, kind: input, shape index: {}]
  %s4 = inlined_call_operand.vmem [shape: bf16[32,5], index: 4, kind: input, shape index: {}]
  %s5 = inlined_call_operand.vmem [shape: bf16[32,6], index: 5, kind: input, shape index: {}]
  %s6 = inlined_call_operand.vmem [shape: f32[32,1], index: 6, kind: input, shape index: {}]
  %s7 = inlined_call_operand.vmem [shape: bf16[2,32,16], index: 7, kind: output, shape index: {0}]
  %s8 = inlined_call_operand.vmem [shape: f32[2,32,1], index: 8, kind: output, shape index: {1}]
  %s9 = inlined_call_operand.vmem [shape: f32[2,32,1], index: 9, kind: output, shape index: {2}]
  %10 = xla_tuple %s7, %s8, %s9
  %s11 = sld [smem:[#allocation0]]
  $region81: #{tpu_custom_call.1} parent=0
    _
  %s13 = ssub.s32 1, %s11
  %s14 = scalar_select 0, %s13, %s11
  loop: start=0, step=1, limit=4
  $region2: #{tpu_custom_call.1} parent=0 // loop_pre_header
    _
  $region3: #{tpu_custom_call.1} parent=0 // loop_header
    %s16 = sphi 0, %s20
    %p17 = scmp.ge.s32.totalorder %s16, 4
    %s23 = sphi 0, %s35
    %s24 = sphi 0, %s31
    %s25 = sphi 0, %s23
    %s26 = sphi 0, %s24
    %s27 = sphi 0, %s25
    %s28 = sphi 0, %s26
    %s40 = sphi 0, %s42
    %s43 = sphi 0, %s40
    %s44 = sphi 0, %s43
    %s60 = sphi 0, %s44
    %s66 = sphi 0, %s68
    %s69 = sphi 0, %s66
    %s70 = sphi 0, %s69
    %s86 = sphi 0, %s70
    %s92 = sphi 0, %s94
    %s95 = sphi 0, %s92
    %s96 = sphi 0, %s95
    %s112 = sphi 0, %s96
    %s120 = sphi 0, %s122
    %s123 = sphi 0, %s120
    %s124 = sphi 0, %s123
    %s140 = sphi 0, %s124
    %s144 = sphi 0, %s144
    %s146 = sphi 0, %s144
    %s147 = sphi 0, %s146
    %s161 = sphi 0, %s147
    %s165 = sphi 0, %s165
    %s167 = sphi 0, %s165
    %s168 = sphi 0, %s167
    %s182 = sphi 0, %s168
    %s186 = sphi 0, %s186
    %s188 = sphi 0, %s186
    %s189 = sphi 0, %s188
    %s203 = sphi 0, %s189
    %s211 = sphi 0, %s213
    %s214 = sphi 0, %s211
    %s215 = sphi 0, %s214
    %s231 = sphi 0, %s215
    %s237 = sphi 0, %s239
    %s240 = sphi 0, %s237
    %s241 = sphi 0, %s240
    %s257 = sphi 0, %s241
    %s263 = sphi 0, %s265
    %s266 = sphi 0, %s263
    %s267 = sphi 0, %s266
    %s283 = sphi 0, %s267
  $region4: #{tpu_custom_call.1} parent=0 // loop_header_branch
    %19 = sbr.rel (%p17) target = $region8
  $region5: #{tpu_custom_call.1} parent=0 // loop_body
    %s21 = ssub.s32 %s16, 1
    %s22 = ssub.s32 %s16, 2
    %s29 = sadd.s32 1, %s24
    %p30 = scmp.ge.s32.totalorder %s29, 1
    %s31 = scalar_select %p30, 0, %s29
    %s32 = sadd.s32 1, %s23
    %s33 = scalar_select %p30, %s32, %s23
    %p34 = scmp.ge.s32.totalorder %s33, 2
    %s35 = scalar_select %p34, 0, %s33
    %s36 = ssub.s32 %s23, %s35
    %s37 = ssub.s32 %s24, %s31
    %s38 = sor.u32 %s36, %s37
    %p39 = scmp.eq.s32.totalorder %s38, 0
    %s41 = sadd.s32 %s40, 1
    %s42 = scalar_select %p39, %s40, %s41
    %p45 = pneg %p39
    %p46 = scmp.eq.s32.totalorder %s16, 1
    %p47 = por %p45, %p46
    %p48 = scmp.ne.s32.totalorder %s40, %s43
    %p49 = scmp.eq.s32.totalorder %s16, 0
    %p50 = por %p48, %p49
    %p51 = scmp.ne.s32.totalorder %s40, %s43
    %p52 = scmp.eq.s32.totalorder %s21, 1
    %p53 = por %p51, %p52
    %p54 = scmp.ne.s32.totalorder %s43, %s44
    %p55 = scmp.eq.s32.totalorder %s21, 0
    %p56 = por %p54, %p55
    %p57 = scmp.ne.s32.totalorder %s43, %s44
    %p58 = scmp.eq.s32.totalorder %s22, 1
    %p59 = por %p57, %p58
    %p61 = scmp.ne.s32.totalorder %s44, %s60
    %p62 = scmp.eq.s32.totalorder %s22, 0
    %p63 = por %p61, %p62
    %s64 = ssub.s32 %s23, %s35
    %p65 = scmp.eq.s32.totalorder %s64, 0
    %s67 = sadd.s32 %s66, 1
    %s68 = scalar_select %p65, %s66, %s67
    %p71 = pneg %p65
    %p72 = scmp.eq.s32.totalorder %s16, 1
    %p73 = por %p71, %p72
    %p74 = scmp.ne.s32.totalorder %s66, %s69
    %p75 = scmp.eq.s32.totalorder %s16, 0
    %p76 = por %p74, %p75
    %p77 = scmp.ne.s32.totalorder %s66, %s69
    %p78 = scmp.eq.s32.totalorder %s21, 1
    %p79 = por %p77, %p78
    %p80 = scmp.ne.s32.totalorder %s69, %s70
    %p81 = scmp.eq.s32.totalorder %s21, 0
    %p82 = por %p80, %p81
    %p83 = scmp.ne.s32.totalorder %s69, %s70
    %p84 = scmp.eq.s32.totalorder %s22, 1
    %p85 = por %p83, %p84
    %p87 = scmp.ne.s32.totalorder %s70, %s86
    %p88 = scmp.eq.s32.totalorder %s22, 0
    %p89 = por %p87, %p88
    %s90 = ssub.s32 %s23, %s35
    %p91 = scmp.eq.s32.totalorder %s90, 0
    %s93 = sadd.s32 %s92, 1
    %s94 = scalar_select %p91, %s92, %s93
    %p97 = pneg %p91
    %p98 = scmp.eq.s32.totalorder %s16, 1
    %p99 = por %p97, %p98
    %p100 = scmp.ne.s32.totalorder %s92, %s95
    %p101 = scmp.eq.s32.totalorder %s16, 0
    %p102 = por %p100, %p101
    %p103 = scmp.ne.s32.totalorder %s92, %s95
    %p104 = scmp.eq.s32.totalorder %s21, 1
    %p105 = por %p103, %p104
    %p106 = scmp.ne.s32.totalorder %s95, %s96
    %p107 = scmp.eq.s32.totalorder %s21, 0
    %p108 = por %p106, %p107
    %p109 = scmp.ne.s32.totalorder %s95, %s96
    %p110 = scmp.eq.s32.totalorder %s22, 1
    %p111 = por %p109, %p110
    %p113 = scmp.ne.s32.totalorder %s96, %s112
    %p114 = scmp.eq.s32.totalorder %s22, 0
    %p115 = por %p113, %p114
    %s116 = ssub.s32 %s23, %s35
    %s117 = ssub.s32 %s24, %s31
    %s118 = sor.u32 %s116, %s117
    %p119 = scmp.eq.s32.totalorder %s118, 0
    %s121 = sadd.s32 %s120, 1
    %s122 = scalar_select %p119, %s120, %s121
    %p125 = pneg %p119
    %p126 = scmp.eq.s32.totalorder %s16, 1
    %p127 = por %p125, %p126
    %p128 = scmp.ne.s32.totalorder %s120, %s123
    %p129 = scmp.eq.s32.totalorder %s16, 0
    %p130 = por %p128, %p129
    %p131 = scmp.ne.s32.totalorder %s120, %s123
    %p132 = scmp.eq.s32.totalorder %s21, 1
    %p133 = por %p131, %p132
    %p134 = scmp.ne.s32.totalorder %s123, %s124
    %p135 = scmp.eq.s32.totalorder %s21, 0
    %p136 = por %p134, %p135
    %p137 = scmp.ne.s32.totalorder %s123, %s124
    %p138 = scmp.eq.s32.totalorder %s22, 1
    %p139 = por %p137, %p138
    %p141 = scmp.ne.s32.totalorder %s124, %s140
    %p142 = scmp.eq.s32.totalorder %s22, 0
    %p143 = por %p141, %p142
    %s145 = sadd.s32 %s144, 1
    %p148 = scmp.eq.s32.totalorder %s16, 1
    %p149 = scmp.ne.s32.totalorder %s144, %s146
    %p150 = scmp.eq.s32.totalorder %s16, 0
    %p151 = por %p149, %p150
    %p152 = scmp.ne.s32.totalorder %s144, %s146
    %p153 = scmp.eq.s32.totalorder %s21, 1
    %p154 = por %p152, %p153
    %p155 = scmp.ne.s32.totalorder %s146, %s147
    %p156 = scmp.eq.s32.totalorder %s21, 0
    %p157 = por %p155, %p156
    %p158 = scmp.ne.s32.totalorder %s146, %s147
    %p159 = scmp.eq.s32.totalorder %s22, 1
    %p160 = por %p158, %p159
    %p162 = scmp.ne.s32.totalorder %s147, %s161
    %p163 = scmp.eq.s32.totalorder %s22, 0
    %p164 = por %p162, %p163
    %s166 = sadd.s32 %s165, 1
    %p169 = scmp.eq.s32.totalorder %s16, 1
    %p170 = scmp.ne.s32.totalorder %s165, %s167
    %p171 = scmp.eq.s32.totalorder %s16, 0
    %p172 = por %p170, %p171
    %p173 = scmp.ne.s32.totalorder %s165, %s167
    %p174 = scmp.eq.s32.totalorder %s21, 1
    %p175 = por %p173, %p174
    %p176 = scmp.ne.s32.totalorder %s167, %s168
    %p177 = scmp.eq.s32.totalorder %s21, 0
    %p178 = por %p176, %p177
    %p179 = scmp.ne.s32.totalorder %s167, %s168
    %p180 = scmp.eq.s32.totalorder %s22, 1
    %p181 = por %p179, %p180
    %p183 = scmp.ne.s32.totalorder %s168, %s182
    %p184 = scmp.eq.s32.totalorder %s22, 0
    %p185 = por %p183, %p184
    %s187 = sadd.s32 %s186, 1
    %p190 = scmp.eq.s32.totalorder %s16, 1
    %p191 = scmp.ne.s32.totalorder %s186, %s188
    %p192 = scmp.eq.s32.totalorder %s16, 0
    %p193 = por %p191, %p192
    %p194 = scmp.ne.s32.totalorder %s186, %s188
    %p195 = scmp.eq.s32.totalorder %s21, 1
    %p196 = por %p194, %p195
    %p197 = scmp.ne.s32.totalorder %s188, %s189
    %p198 = scmp.eq.s32.totalorder %s21, 0
    %p199 = por %p197, %p198
    %p200 = scmp.ne.s32.totalorder %s188, %s189
    %p201 = scmp.eq.s32.totalorder %s22, 1
    %p202 = por %p200, %p201
    %p204 = scmp.ne.s32.totalorder %s189, %s203
    %p205 = scmp.eq.s32.totalorder %s22, 0
    %p206 = por %p204, %p205
    %s207 = ssub.s32 %s23, %s35
    %s208 = ssub.s32 %s24, %s31
    %s209 = sor.u32 %s207, %s208
    %p210 = scmp.eq.s32.totalorder %s209, 0
    %s212 = sadd.s32 %s211, 1
    %s213 = scalar_select %p210, %s211, %s212
    %p216 = pneg %p210
    %p217 = scmp.eq.s32.totalorder %s16, 1
    %p218 = por %p216, %p217
    %p219 = scmp.ne.s32.totalorder %s211, %s214
    %p220 = scmp.eq.s32.totalorder %s16, 0
    %p221 = por %p219, %p220
    %p222 = scmp.ne.s32.totalorder %s211, %s214
    %p223 = scmp.eq.s32.totalorder %s21, 1
    %p224 = por %p222, %p223
    %p225 = scmp.ne.s32.totalorder %s214, %s215
    %p226 = scmp.eq.s32.totalorder %s21, 0
    %p227 = por %p225, %p226
    %p228 = scmp.ne.s32.totalorder %s214, %s215
    %p229 = scmp.eq.s32.totalorder %s22, 1
    %p230 = por %p228, %p229
    %p232 = scmp.ne.s32.totalorder %s215, %s231
    %p233 = scmp.eq.s32.totalorder %s22, 0
    %p234 = por %p232, %p233
    %s235 = ssub.s32 %s23, %s35
    %p236 = scmp.eq.s32.totalorder %s235, 0
    %s238 = sadd.s32 %s237, 1
    %s239 = scalar_select %p236, %s237, %s238
    %p242 = pneg %p236
    %p243 = scmp.eq.s32.totalorder %s16, 1
    %p244 = por %p242, %p243
    %p245 = scmp.ne.s32.totalorder %s237, %s240
    %p246 = scmp.eq.s32.totalorder %s16, 0
    %p247 = por %p245, %p246
    %p248 = scmp.ne.s32.totalorder %s237, %s240
    %p249 = scmp.eq.s32.totalorder %s21, 1
    %p250 = por %p248, %p249
    %p251 = scmp.ne.s32.totalorder %s240, %s241
    %p252 = scmp.eq.s32.totalorder %s21, 0
    %p253 = por %p251, %p252
    %p254 = scmp.ne.s32.totalorder %s240, %s241
    %p255 = scmp.eq.s32.totalorder %s22, 1
    %p256 = por %p254, %p255
    %p258 = scmp.ne.s32.totalorder %s241, %s257
    %p259 = scmp.eq.s32.totalorder %s22, 0
    %p260 = por %p258, %p259
    %s261 = ssub.s32 %s23, %s35
    %p262 = scmp.eq.s32.totalorder %s261, 0
    %s264 = sadd.s32 %s263, 1
    %s265 = scalar_select %p262, %s263, %s264
    %p268 = pneg %p262
    %p269 = scmp.eq.s32.totalorder %s16, 1
    %p270 = por %p268, %p269
    %p271 = scmp.ne.s32.totalorder %s263, %s266
    %p272 = scmp.eq.s32.totalorder %s16, 0
    %p273 = por %p271, %p272
    %p274 = scmp.ne.s32.totalorder %s263, %s266
    %p275 = scmp.eq.s32.totalorder %s21, 1
    %p276 = por %p274, %p275
    %p277 = scmp.ne.s32.totalorder %s266, %s267
    %p278 = scmp.eq.s32.totalorder %s21, 0
    %p279 = por %p277, %p278
    %p280 = scmp.ne.s32.totalorder %s266, %s267
    %p281 = scmp.eq.s32.totalorder %s22, 1
    %p282 = por %p280, %p281
    %p284 = scmp.ne.s32.totalorder %s267, %s283
    %p285 = scmp.eq.s32.totalorder %s22, 0
    %p286 = por %p284, %p285
    %p287 = scmp.le.s32.totalorder 1, %s16
    %p288 = scmp.lt.s32.totalorder %s16, 3
    %p289 = pnand %p287, %p288
    %p290 = pneg %p289
    // Predicated region
    $region9: #{tpu_custom_call.1} parent=5 // pred_check
      _
    $region10: #{tpu_custom_call.1} parent=5 // pred_check_branch
      %292 = sbr.rel (%p289) target = $region12
    $region11: #{tpu_custom_call.1} parent=5 // pred_region
      %s293 = ssub.s32 %s16, 1
      // Predicated region
      $region13: #{tpu_custom_call.1} parent=11 // pred_check
        %p294 = pneg %p157
      $region14: #{tpu_custom_call.1} parent=11 // pred_check_branch
        %296 = sbr.rel (%p294) target = $region16
      $region15: #{tpu_custom_call.1} parent=11 // pred_region
        _
      $region16: #{tpu_custom_call.1} parent=11 // pred_fallthru
        _
      // Predicated region
      $region17: #{tpu_custom_call.1} parent=11 // pred_check
        %p297 = pneg %p178
      $region18: #{tpu_custom_call.1} parent=11 // pred_check_branch
        %299 = sbr.rel (%p297) target = $region20
      $region19: #{tpu_custom_call.1} parent=11 // pred_region
        _
      $region20: #{tpu_custom_call.1} parent=11 // pred_fallthru
        _
      // Predicated region
      $region21: #{tpu_custom_call.1} parent=11 // pred_check
        %p300 = pneg %p199
      $region22: #{tpu_custom_call.1} parent=11 // pred_check_branch
        %302 = sbr.rel (%p300) target = $region24
      $region23: #{tpu_custom_call.1} parent=11 // pred_region
        _
      $region24: #{tpu_custom_call.1} parent=11 // pred_fallthru
        _
    $region12: #{tpu_custom_call.1} parent=5 // pred_fallthru
      _
    %p303 = scmp.lt.s32.totalorder %s16, 2
    // Predicated region
    $region25: #{tpu_custom_call.1} parent=5 // pred_check
      %p304 = pneg %p303
    $region26: #{tpu_custom_call.1} parent=5 // pred_check_branch
      %306 = sbr.rel (%p304) target = $region28
    $region27: #{tpu_custom_call.1} parent=5 // pred_region
      // Predicated region
      $region29: #{tpu_custom_call.1} parent=27 // pred_check
        %p307 = pneg %p50
      $region30: #{tpu_custom_call.1} parent=27 // pred_check_branch
        %309 = sbr.rel (%p307) target = $region32
      $region31: #{tpu_custom_call.1} parent=27 // pred_region
        %p310 = scmp.lt.s32.totalorder %s23, 1
        %s311 = scalar_select %p310, %s23, 1
        %p312 = scmp.lt.s32.totalorder %s24, 0
        %s313 = scalar_select %p312, %s24, 0
        %s314 = sadd.s32 %s313, %s311
        %s315 = smul.addr %s314, 4
        %s316 = scalar_lea.vmem %s0, %s315
      $region32: #{tpu_custom_call.1} parent=27 // pred_fallthru
        _
      // Predicated region
      $region33: #{tpu_custom_call.1} parent=27 // pred_check
        %p317 = pneg %p76
      $region34: #{tpu_custom_call.1} parent=27 // pred_check_branch
        %319 = sbr.rel (%p317) target = $region36
      $region35: #{tpu_custom_call.1} parent=27 // pred_region
        %p320 = scmp.lt.s32.totalorder %s23, 1
        %s321 = scalar_select %p320, %s23, 1
        %s322 = smul.addr %s321, 8
        %s323 = scalar_lea.vmem %s1, %s322
      $region36: #{tpu_custom_call.1} parent=27 // pred_fallthru
        _
      // Predicated region
      $region37: #{tpu_custom_call.1} parent=27 // pred_check
        %p324 = pneg %p102
      $region38: #{tpu_custom_call.1} parent=27 // pred_check_branch
        %326 = sbr.rel (%p324) target = $region40
      $region39: #{tpu_custom_call.1} parent=27 // pred_region
        %p327 = scmp.lt.s32.totalorder %s23, 1
        %s328 = scalar_select %p327, %s23, 1
        %s329 = smul.addr %s328, 4
        %s330 = scalar_lea.vmem %s2, %s329
      $region40: #{tpu_custom_call.1} parent=27 // pred_fallthru
        _
      // Predicated region
      $region41: #{tpu_custom_call.1} parent=27 // pred_check
        %p331 = pneg %p130
      $region42: #{tpu_custom_call.1} parent=27 // pred_check_branch
        %333 = sbr.rel (%p331) target = $region44
      $region43: #{tpu_custom_call.1} parent=27 // pred_region
        %p334 = scmp.lt.s32.totalorder %s23, 1
        %s335 = scalar_select %p334, %s23, 1
        %p336 = scmp.lt.s32.totalorder %s24, 0
        %s337 = scalar_select %p336, %s24, 0
        %s338 = sadd.s32 %s337, %s335
        %s339 = smul.addr %s338, 8
        %s340 = scalar_lea.vmem %s3, %s339
      $region44: #{tpu_custom_call.1} parent=27 // pred_fallthru
        _
    $region28: #{tpu_custom_call.1} parent=5 // pred_fallthru
      _
    %p341 = scmp.le.s32.totalorder 1, %s16
    %p342 = scmp.lt.s32.totalorder %s16, 3
    %p343 = pnand %p341, %p342
    %p344 = pneg %p343
    // Predicated region
    $region45: #{tpu_custom_call.1} parent=5 // pred_check
      _
    $region46: #{tpu_custom_call.1} parent=5 // pred_check_branch
      %346 = sbr.rel (%p343) target = $region48
    $region47: #{tpu_custom_call.1} parent=5 // pred_region
      %s347 = ssub.s32 %s16, 1
      %p348 = scmp.lt.s32.totalorder %s25, 1
      %s349 = scalar_select %p348, %s25, 1
      %p350 = scmp.lt.s32.totalorder %s26, 0
      %s351 = scalar_select %p350, %s26, 0
      %s352 = sadd.s32 %s351, %s349
      %s353 = smul.addr %s352, 4
      %s354 = scalar_lea.vmem %s0, %s353
      %p355 = pneg %p56
      %p356 = pneg %p53
      %p357 = scmp.lt.s32.totalorder %s25, 1
      %s358 = scalar_select %p357, %s25, 1
      %s359 = smul.addr %s358, 8
      %s360 = scalar_lea.vmem %s1, %s359
      %p361 = pneg %p82
      %p362 = pneg %p79
      %p363 = scmp.lt.s32.totalorder %s25, 1
      %s364 = scalar_select %p363, %s25, 1
      %s365 = smul.addr %s364, 4
      %s366 = scalar_lea.vmem %s2, %s365
      %p367 = pneg %p108
      %p368 = pneg %p105
      %p369 = scmp.lt.s32.totalorder %s25, 1
      %s370 = scalar_select %p369, %s25, 1
      %p371 = scmp.lt.s32.totalorder %s26, 0
      %s372 = scalar_select %p371, %s26, 0
      %s373 = sadd.s32 %s372, %s370
      %s374 = smul.addr %s373, 8
      %s375 = scalar_lea.vmem %s3, %s374
      %p376 = pneg %p136
      %p377 = pneg %p133
      %p378 = pneg %p157
      %p379 = pneg %p154
      %p380 = pneg %p178
      %p381 = pneg %p175
      %p382 = pneg %p199
      %p383 = pneg %p196
      %p384 = pneg %p227
      %p385 = pneg %p224
      %p386 = scmp.lt.s32.totalorder %s25, 1
      %s387 = scalar_select %p386, %s25, 1
      %p388 = scmp.lt.s32.totalorder %s26, 0
      %s389 = scalar_select %p388, %s26, 0
      %s390 = smul.addr %s387, 4
      %s391 = sadd.s32 %s389, %s390
      %s392 = smul.addr %s391, 4
      %s393 = scalar_lea.vmem %s7, %s392
      %p394 = pneg %p253
      %p395 = pneg %p250
      %p396 = scmp.lt.s32.totalorder %s25, 1
      %s397 = scalar_select %p396, %s25, 1
      %s398 = smul.addr %s397, 4
      %s399 = smul.addr %s398, 8
      %s400 = scalar_lea.vmem %s8, %s399
      %p401 = pneg %p279
      %p402 = pneg %p276
      %p403 = scmp.lt.s32.totalorder %s25, 1
      %s404 = scalar_select %p403, %s25, 1
      %s405 = smul.addr %s404, 4
      %s406 = smul.addr %s405, 8
      %s407 = scalar_lea.vmem %s9, %s406
      %p408 = scmp.lt.s32.totalorder %s25, 1
      %s409 = scalar_select %p408, %s25, 1
      %p410 = scmp.lt.s32.totalorder %s26, 0
      %s411 = scalar_select %p410, %s26, 0
      %s412 = sadd.s32 %s411, %s409
      %s413 = smul.addr %s412, 4
      %s414 = scalar_lea.vmem %s0, %s413
      %p415 = scmp.lt.s32.totalorder %s25, 1
      %s416 = scalar_select %p415, %s25, 1
      %s417 = smul.addr %s416, 8
      %s418 = scalar_lea.vmem %s1, %s417
      %p419 = scmp.lt.s32.totalorder %s25, 1
      %s420 = scalar_select %p419, %s25, 1
      %s421 = smul.addr %s420, 4
      %s422 = scalar_lea.vmem %s2, %s421
      %p423 = scmp.lt.s32.totalorder %s25, 1
      %s424 = scalar_select %p423, %s25, 1
      %p425 = scmp.lt.s32.totalorder %s26, 0
      %s426 = scalar_select %p425, %s26, 0
      %s427 = sadd.s32 %s426, %s424
      %s428 = smul.addr %s427, 8
      %s429 = scalar_lea.vmem %s3, %s428
      %p430 = scmp.lt.s32.totalorder %s25, 1
      %s431 = scalar_select %p430, %s25, 1
      %p432 = scmp.lt.s32.totalorder %s26, 0
      %s433 = scalar_select %p432, %s26, 0
      %s434 = smul.addr %s431, 4
      %s435 = sadd.s32 %s433, %s434
      %s436 = smul.addr %s435, 4
      %s437 = scalar_lea.vmem %s7, %s436
      %p438 = scmp.lt.s32.totalorder %s25, 1
      %s439 = scalar_select %p438, %s25, 1
      %s440 = smul.addr %s439, 4
      %s441 = smul.addr %s440, 8
      %s442 = scalar_lea.vmem %s8, %s441
      %p443 = scmp.lt.s32.totalorder %s25, 1
      %s444 = scalar_select %p443, %s25, 1
      %s445 = smul.addr %s444, 4
      %s446 = smul.addr %s445, 8
      %s447 = scalar_lea.vmem %s9, %s446
      %v449 = vld [vmem:[%s414] sm:$0x7]
      %v450 = vld [vmem:[%s418] sm:$0xff]
      %v451 = vld [vmem:[%s422] sm:$0x7]
      %453 = vset.pattern.permute.xlu0 0
      %454 = vperm.xlu0 %453, %v450
      %v455 = vpop.permute.xlu0 %454
      %v457 = vperm.slane %v449, 0
      %v458 = vsub.f32 %v455, %v457
      %v459 = vmul.f32 %v458, %v458
      %460 = vset.pattern.permute.xlu0 1
      %461 = vperm.xlu0 %460, %v450
      %v462 = vpop.permute.xlu0 %461
      %v464 = vperm.slane %v449, 1
      %v465 = vsub.f32 %v462, %v464
      %v466 = vmul.f32 %v465, %v465
      %v467 = vadd.f32 %v459, %v466
      %468 = vset.pattern.permute.xlu0 2
      %469 = vperm.xlu0 %468, %v450
      %v470 = vpop.permute.xlu0 %469
      %v472 = vperm.slane %v449, 2
      %v473 = vsub.f32 %v470, %v472
      %v474 = vmul.f32 %v473, %v473
      %v475 = vadd.f32 %v467, %v474
      %v476 = vlaneseq
      %v477 = vshrl.u32 %v476, 7
      %v479 = vand.u32 %v475, 4294967288
      %v480 = vor.u32 %v479, %v477
      %vm481 = vcmask 130048
      %v482 = vsel %vm481, %v480, 2147483647
      %v483 = vrot.slane %v482, 4
      %vm484 = vcmp.lt.s32.totalorder %v482, %v483
      %v485 = vsel %vm484, %v482, %v483
      %v486 = vrot.slane %v485, 2
      %vm487 = vcmp.lt.s32.totalorder %v485, %v486
      %v488 = vsel %vm487, %v485, %v486
      %v489 = vrot.slane %v488, 1
      %vm490 = vcmp.lt.s32.totalorder %v488, %v489
      %v491 = vsel %vm490, %v488, %v489
      %v492 = vand.u32 %v491, 4294967288
      %v494 = vadd.f32 %v492, 1e-08
      %v495 = vrcp.pop %v494
      %vm496 = vcmp.eq.s32.totalorder %v480, %v491
      %v497 = vsel %vm496, %v495, 0.0
      %v498 = vsel %vm496, 2139095040, %v480
      %v499 = vsel %vm481, %v498, 2147483647
      %v500 = vrot.slane %v499, 4
      %vm501 = vcmp.lt.s32.totalorder %v499, %v500
      %v502 = vsel %vm501, %v499, %v500
      %v503 = vrot.slane %v502, 2
      %vm504 = vcmp.lt.s32.totalorder %v502, %v503
      %v505 = vsel %vm504, %v502, %v503
      %v506 = vrot.slane %v505, 1
      %vm507 = vcmp.lt.s32.totalorder %v505, %v506
      %v508 = vsel %vm507, %v505, %v506
      %v509 = vand.u32 %v508, 4294967288
      %v511 = vadd.f32 %v509, 1e-08
      %v512 = vrcp.pop %v511
      %vm513 = vcmp.eq.s32.totalorder %v498, %v508
      %v514 = vsel %vm513, %v512, 0.0
      %v515 = vadd.f32 %v497, %v514
      %v516 = vsel %vm513, 2139095040, %v498
      %v517 = vsel %vm481, %v516, 2147483647
      %v518 = vrot.slane %v517, 4
      %vm519 = vcmp.lt.s32.totalorder %v517, %v518
      %v520 = vsel %vm519, %v517, %v518
      %v521 = vrot.slane %v520, 2
      %vm522 = vcmp.lt.s32.totalorder %v520, %v521
      %v523 = vsel %vm522, %v520, %v521
      %v524 = vrot.slane %v523, 1
      %vm525 = vcmp.lt.s32.totalorder %v523, %v524
      %v526 = vsel %vm525, %v523, %v524
      %v527 = vand.u32 %v526, 4294967288
      %v529 = vadd.f32 %v527, 1e-08
      %v530 = vrcp.pop %v529
      %vm531 = vcmp.eq.s32.totalorder %v516, %v526
      %v532 = vsel %vm531, %v530, 0.0
      %v533 = vadd.f32 %v515, %v532
      %v534 = vsel %vm481, %v533, 0.0
      %v535 = vrot.slane %v534, 4
      %v536 = vadd.f32 %v534, %v535
      %v537 = vrot.slane %v536, 2
      %v538 = vadd.f32 %v536, %v537
      %v539 = vrot.slane %v538, 1
      %v540 = vadd.f32 %v538, %v539
      %v541 = vrcp.pop %v540
      %v542 = vmul.f32 %v533, %v541
      %v543 = vpack.c.bf16 %v542, %v542
      %vm544 = vcmask 64512
      %v546 = vsel %vm544, %v451, 0
      %vm548 = vcmask 1043456
      %v550 = vsel %vm548, %v543, 0
      %552 = vmatpush.bf16.msra.mxu0 0
      %553 = vmatpush.bf16.msra.mxu0 0
      %554 = vmatpush.bf16.msra.mxu0 0
      %555 = vmatpush.bf16.msra.mxu0 0
      %556 = vmatpush.bf16.msra.mxu0 0
      %557 = vmatpush.bf16.msra.mxu0 0
      %558 = vmatpush.bf16.msra.mxu0 0
      %559 = vmatpush.bf16.msra.mxu0 %v550
      %560 = vmatmul.bf16.gmra.mxu0 %v546
      %v561 = vpop.f32.mrf.mxu0
      %v562 = vadd.f32 0.0, %v561
      %v563 = vpop.f32.mrf.mxu0
      %564 = vdwg.mxu0
      %v565 = vld [vmem:[%s4] sm:$0xf]
      %v566 = vld [vmem:[%s4 + $0x4] sm:$0xf]
      %v567 = vld [vmem:[%s4 + $0x8] sm:$0xf]
      %v568 = vld [vmem:[%s4 + $0xc] sm:$0xf]
      %v569 = vld [vmem:[%s429] sm:$0x1f]
      %v570 = vpack.c.bf16 %v569, %v569
      %v571 = vld [vmem:[%s5] sm:$0xf]
      %v572 = vld [vmem:[%s5 + $0x4] sm:$0xf]
      %v573 = vld [vmem:[%s5 + $0x8] sm:$0xf]
      %v574 = vld [vmem:[%s5 + $0xc] sm:$0xf]
      %v575 = vpack.c.bf16 %v562, %v562
      %v580 = vunpack.c.l.b16 %v571
      %v581 = vunpack.c.l.b16 %v572
      %v582 = vunpack.c.l.b16 %v573
      %v583 = vunpack.c.l.b16 %v574
      %v584 = vpack.c.b16 %v581, %v580
      %v585 = vpack.c.b16 %v583, %v582
      %vm586 = vcmask 48128
      %v588 = vsel %vm586, %v584, 0
      %v591 = vsel %vm586, %v585, 0
      %vm593 = vcmask 1042432
      %v595 = vsel %vm593, %v575, 0
      %597 = vmatpush.bf16.msra.mxu0 0
      %598 = vmatpush.bf16.msra.mxu0 0
      %599 = vmatpush.bf16.msra.mxu0 0
      %600 = vmatpush.bf16.msra.mxu0 0
      %601 = vmatpush.bf16.msra.mxu0 0
      %602 = vmatpush.bf16.msra.mxu0 0
      %603 = vmatpush.bf16.msra.mxu0 0
      %604 = vmatpush.bf16.msra.mxu0 %v595
      %605 = vmatmul.bf16.gmra.mxu0 %v588
      %v606 = vpop.f32.mrf.mxu0
      %v607 = vadd.f32 0.0, %v606
      %v608 = vpop.f32.mrf.mxu0
      %v609 = vadd.f32 0.0, %v608
      %610 = vmatmul.bf16.gmra.mxu0 %v591
      %v611 = vpop.f32.mrf.mxu0
      %v612 = vadd.f32 0.0, %v611
      %v613 = vpop.f32.mrf.mxu0
      %v614 = vadd.f32 0.0, %v613
      %615 = vdwg.mxu0
      %v620 = vunpack.c.l.b16 %v565
      %v621 = vunpack.c.l.b16 %v566
      %v622 = vunpack.c.l.b16 %v567
      %v623 = vunpack.c.l.b16 %v568
      %v624 = vpack.c.b16 %v621, %v620
      %v625 = vpack.c.b16 %v623, %v622
      %vm626 = vcmask 39936
      %v628 = vsel %vm626, %v624, 0
      %v631 = vsel %vm626, %v625, 0
      %vm633 = vcmask 1041408
      %v634 = vsel %vm633, 4294967295, 65535
      %v635 = vsel %vm593, %v634, 0
      %v637 = vand.u32 %v570, %v635
      %639 = vmatpush.bf16.msra.mxu0 0
      %640 = vmatpush.bf16.msra.mxu0 0
      %641 = vmatpush.bf16.msra.mxu0 0
      %642 = vmatpush.bf16.msra.mxu0 0
      %643 = vmatpush.bf16.msra.mxu0 0
      %644 = vmatpush.bf16.msra.mxu0 0
      %645 = vmatpush.bf16.msra.mxu0 0
      %646 = vmatpush.bf16.msra.mxu0 %v637
      %647 = vmatmul.bf16.gmra.mxu0 %v628
      %v648 = vpop.f32.mrf.mxu0
      %v649 = vadd.f32 %v607, %v648
      %v650 = vpop.f32.mrf.mxu0
      %v651 = vadd.f32 %v609, %v650
      %652 = vmatmul.bf16.gmra.mxu0 %v631
      %v653 = vpop.f32.mrf.mxu0
      %v654 = vadd.f32 %v612, %v653
      %v655 = vpop.f32.mrf.mxu0
      %v656 = vadd.f32 %v614, %v655
      %657 = vdwg.mxu0
      %v658 = vld [vmem:[%s6] sm:$0xff]
      %v659 = vld [vmem:[%s6 + $0x8] sm:$0xff]
      %v660 = vld [vmem:[%s6 + $0x10] sm:$0xff]
      %v661 = vld [vmem:[%s6 + $0x18] sm:$0xff]
      %663 = vset.pattern.permute.xlu0 0
      %664 = vperm.xlu0 %663, %v658
      %v665 = vpop.permute.xlu0 %664
      %668 = vset.pattern.permute.xlu0 0
      %669 = vperm.xlu0 %668, %v659
      %v670 = vpop.permute.xlu0 %669
      %673 = vset.pattern.permute.xlu0 0
      %674 = vperm.xlu0 %673, %v660
      %v675 = vpop.permute.xlu0 %674
      %678 = vset.pattern.permute.xlu0 0
      %679 = vperm.xlu0 %678, %v661
      %v680 = vpop.permute.xlu0 %679
      %v682 = vadd.f32 %v649, %v665
      %v683 = vadd.f32 %v651, %v670
      %v684 = vadd.f32 %v654, %v675
      %v685 = vadd.f32 %v656, %v680
      %v686 = vpack.c.bf16 %v682, %v682
      %v687 = vpack.c.bf16 %v683, %v683
      %v688 = vpack.c.bf16 %v684, %v684
      %v689 = vpack.c.bf16 %v685, %v685
      %vm690 = vcmask 125952
      %691 = vst.msk [vmem:[%s437] sm:$0xf] %vm690, %v686
      %692 = vst.msk [vmem:[%s437 + $0x4] sm:$0xf] %vm690, %v687
      %693 = vst.msk [vmem:[%s437 + $0x8] sm:$0xf] %vm690, %v688
      %694 = vst.msk [vmem:[%s437 + $0xc] sm:$0xf] %vm690, %v689
      %p695 = scmp.eq.s32.totalorder %s26, 0
      // Predicated region
      $region49: #{tpu_custom_call.1} parent=47 // pred_check
        %p696 = pneg %p695
      $region50: #{tpu_custom_call.1} parent=47 // pred_check_branch
        %698 = sbr.rel (%p696) target = $region52
      $region51: #{tpu_custom_call.1} parent=47 // pred_region
        %vm699 = vcmask 7168
        %700 = vst.msk [vmem:[%s442] sm:$0xff] %vm699, 0.0
        %701 = vst.msk [vmem:[%s442 + $0x8] sm:$0xff] %vm699, 0.0
        %702 = vst.msk [vmem:[%s442 + $0x10] sm:$0xff] %vm699, 0.0
        %703 = vst.msk [vmem:[%s442 + $0x18] sm:$0xff] %vm699, 0.0
        %704 = vst.msk [vmem:[%s447] sm:$0xff] %vm699, 0.0
        %705 = vst.msk [vmem:[%s447 + $0x8] sm:$0xff] %vm699, 0.0
        %706 = vst.msk [vmem:[%s447 + $0x10] sm:$0xff] %vm699, 0.0
        %707 = vst.msk [vmem:[%s447 + $0x18] sm:$0xff] %vm699, 0.0
      $region52: #{tpu_custom_call.1} parent=47 // pred_fallthru
        _
      %v708 = vld [vmem:[%s442] sm:$0xff]
      %v709 = vld [vmem:[%s442 + $0x8] sm:$0xff]
      %v710 = vld [vmem:[%s442 + $0x10] sm:$0xff]
      %v711 = vld [vmem:[%s442 + $0x18] sm:$0xff]
      %v712 = vsel %vm481, %v682, 0.0
      %713 = vadd.xlane.f32.xlu0 %v712
      %v714 = vpop.xlane.xlu0 %713
      %v715 = vsel %vm481, %v683, 0.0
      %716 = vadd.xlane.f32.xlu0 %v715
      %v717 = vpop.xlane.xlu0 %716
      %v718 = vsel %vm481, %v684, 0.0
      %719 = vadd.xlane.f32.xlu0 %v718
      %v720 = vpop.xlane.xlu0 %719
      %v721 = vsel %vm481, %v685, 0.0
      %722 = vadd.xlane.f32.xlu0 %v721
      %v723 = vpop.xlane.xlu0 %722
      %v724 = vadd.f32 %v708, %v714
      %v725 = vadd.f32 %v709, %v717
      %v726 = vadd.f32 %v710, %v720
      %v727 = vadd.f32 %v711, %v723
      %vm728 = vcmask 7168
      %729 = vst.msk [vmem:[%s442] sm:$0xff] %vm728, %v724
      %730 = vst.msk [vmem:[%s442 + $0x8] sm:$0xff] %vm728, %v725
      %731 = vst.msk [vmem:[%s442 + $0x10] sm:$0xff] %vm728, %v726
      %732 = vst.msk [vmem:[%s442 + $0x18] sm:$0xff] %vm728, %v727
      %v733 = vld [vmem:[%s447] sm:$0xff]
      %v734 = vld [vmem:[%s447 + $0x8] sm:$0xff]
      %v735 = vld [vmem:[%s447 + $0x10] sm:$0xff]
      %v736 = vld [vmem:[%s447 + $0x18] sm:$0xff]
      %v737 = vmul.f32 %v682, %v682
      %v738 = vmul.f32 %v683, %v683
      %v739 = vmul.f32 %v684, %v684
      %v740 = vmul.f32 %v685, %v685
      %v741 = vsel %vm481, %v737, 0.0
      %742 = vadd.xlane.f32.xlu0 %v741
      %v743 = vpop.xlane.xlu0 %742
      %v744 = vsel %vm481, %v738, 0.0
      %745 = vadd.xlane.f32.xlu0 %v744
      %v746 = vpop.xlane.xlu0 %745
      %v747 = vsel %vm481, %v739, 0.0
      %748 = vadd.xlane.f32.xlu0 %v747
      %v749 = vpop.xlane.xlu0 %748
      %v750 = vsel %vm481, %v740, 0.0
      %751 = vadd.xlane.f32.xlu0 %v750
      %v752 = vpop.xlane.xlu0 %751
      %v753 = vadd.f32 %v733, %v743
      %v754 = vadd.f32 %v734, %v746
      %v755 = vadd.f32 %v735, %v749
      %v756 = vadd.f32 %v736, %v752
      %757 = vst.msk [vmem:[%s447] sm:$0xff] %vm728, %v753
      %758 = vst.msk [vmem:[%s447 + $0x8] sm:$0xff] %vm728, %v754
      %759 = vst.msk [vmem:[%s447 + $0x10] sm:$0xff] %vm728, %v755
      %760 = vst.msk [vmem:[%s447 + $0x18] sm:$0xff] %vm728, %v756
      %p761 = scmp.lt.s32.totalorder %s25, 1
      %s762 = scalar_select %p761, %s25, 1
      %p763 = scmp.lt.s32.totalorder %s26, 0
      %s764 = scalar_select %p763, %s26, 0
      %s765 = smul.addr %s762, 4
      %s766 = sadd.s32 %s764, %s765
      %s767 = smul.addr %s766, 4
      %s768 = scalar_lea.vmem %s7, %s767
      %p769 = scmp.lt.s32.totalorder %s25, 1
      %s770 = scalar_select %p769, %s25, 1
      %s771 = smul.addr %s770, 4
      %s772 = smul.addr %s771, 8
      %s773 = scalar_lea.vmem %s8, %s772
      %p774 = scmp.lt.s32.totalorder %s25, 1
      %s775 = scalar_select %p774, %s25, 1
      %s776 = smul.addr %s775, 4
      %s777 = smul.addr %s776, 8
      %s778 = scalar_lea.vmem %s9, %s777
      // Predicated region
      $region53: #{tpu_custom_call.1} parent=47 // pred_check
        %p779 = pneg %p224
      $region54: #{tpu_custom_call.1} parent=47 // pred_check_branch
        %781 = sbr.rel (%p779) target = $region56
      $region55: #{tpu_custom_call.1} parent=47 // pred_region
        _
      $region56: #{tpu_custom_call.1} parent=47 // pred_fallthru
        _
      // Predicated region
      $region57: #{tpu_custom_call.1} parent=47 // pred_check
        %p782 = pneg %p250
      $region58: #{tpu_custom_call.1} parent=47 // pred_check_branch
        %784 = sbr.rel (%p782) target = $region60
      $region59: #{tpu_custom_call.1} parent=47 // pred_region
        _
      $region60: #{tpu_custom_call.1} parent=47 // pred_fallthru
        _
      // Predicated region
      $region61: #{tpu_custom_call.1} parent=47 // pred_check
        %p785 = pneg %p276
      $region62: #{tpu_custom_call.1} parent=47 // pred_check_branch
        %787 = sbr.rel (%p785) target = $region64
      $region63: #{tpu_custom_call.1} parent=47 // pred_region
        _
      $region64: #{tpu_custom_call.1} parent=47 // pred_fallthru
        _
    $region48: #{tpu_custom_call.1} parent=5 // pred_fallthru
      _
    %p788 = scmp.le.s32.totalorder 2, %s16
    // Predicated region
    $region65: #{tpu_custom_call.1} parent=5 // pred_check
      %p789 = pneg %p788
    $region66: #{tpu_custom_call.1} parent=5 // pred_check_branch
      %791 = sbr.rel (%p789) target = $region68
    $region67: #{tpu_custom_call.1} parent=5 // pred_region
      %s792 = ssub.s32 %s16, 2
      // Predicated region
      $region69: #{tpu_custom_call.1} parent=67 // pred_check
        %p793 = pneg %p230
      $region70: #{tpu_custom_call.1} parent=67 // pred_check_branch
        %795 = sbr.rel (%p793) target = $region72
      $region71: #{tpu_custom_call.1} parent=67 // pred_region
        %p796 = scmp.lt.s32.totalorder %s27, 1
        %s797 = scalar_select %p796, %s27, 1
        %p798 = scmp.lt.s32.totalorder %s28, 0
        %s799 = scalar_select %p798, %s28, 0
        %s800 = smul.addr %s797, 4
        %s801 = sadd.s32 %s799, %s800
        %s802 = smul.addr %s801, 4
        %s803 = scalar_lea.vmem %s7, %s802
      $region72: #{tpu_custom_call.1} parent=67 // pred_fallthru
        _
      // Predicated region
      $region73: #{tpu_custom_call.1} parent=67 // pred_check
        %p804 = pneg %p256
      $region74: #{tpu_custom_call.1} parent=67 // pred_check_branch
        %806 = sbr.rel (%p804) target = $region76
      $region75: #{tpu_custom_call.1} parent=67 // pred_region
        %p807 = scmp.lt.s32.totalorder %s27, 1
        %s808 = scalar_select %p807, %s27, 1
        %s809 = smul.addr %s808, 4
        %s810 = smul.addr %s809, 8
        %s811 = scalar_lea.vmem %s8, %s810
      $region76: #{tpu_custom_call.1} parent=67 // pred_fallthru
        _
      // Predicated region
      $region77: #{tpu_custom_call.1} parent=67 // pred_check
        %p812 = pneg %p282
      $region78: #{tpu_custom_call.1} parent=67 // pred_check_branch
        %814 = sbr.rel (%p812) target = $region80
      $region79: #{tpu_custom_call.1} parent=67 // pred_region
        %p815 = scmp.lt.s32.totalorder %s27, 1
        %s816 = scalar_select %p815, %s27, 1
        %s817 = smul.addr %s816, 4
        %s818 = smul.addr %s817, 8
        %s819 = scalar_lea.vmem %s9, %s818
      $region80: #{tpu_custom_call.1} parent=67 // pred_fallthru
        _
    $region68: #{tpu_custom_call.1} parent=5 // pred_fallthru
      _
  $region6: #{tpu_custom_call.1} parent=0 // loop_footer
    %s20 = sadd.s32 1, %s16
  $region7: #{tpu_custom_call.1} parent=0 // loop_footer_branch
    %15 = sbr.rel target = $region3
  $region8: #{tpu_custom_call.1} parent=0 // loop_exit
    _

</llo_original>
